<compile_context>
chip_gen: v6e
topology: v6e:2x2x1
jax: 0.10.0
libtpu: 0.0.40
codegen_flags: <defaults>
</compile_context>

<pallas_src>
import functools

import jax
import jax.numpy as jnp
from jax.experimental import pallas as pl
from jax.experimental.pallas import tpu as pltpu

ALPHA = 1.0
GAMMA = 2.0


def _round_up(x: int, m: int) -> int:
    return (x + m - 1) // m * m


def _vmem_capacity_bytes() -> int:
    try:
        info = pltpu.get_tpu_info()
        cap = getattr(info, "vmem_capacity_bytes", None)
        if cap:
            return int(cap)
    except Exception:
        pass
    return 128 * 1024 * 1024


def _choose_tile(n: int, c: int, itemsize: int, block_rows=None):
    """Pick the batch tile (rows) and the scoped-VMEM limit per TPU generation."""
    cap = _vmem_capacity_bytes()
    if cap <= 80 * 1024 * 1024:                 # v7x-class: 64 MiB VMEM per TensorCore
        buf_budget, limit_cap = 6 << 20, 48 << 20
    else:                                       # v5e / v6e: 128 MiB VMEM
        buf_budget, limit_cap = 16 << 20, 96 << 20

    if block_rows is not None:
        tn = max(8, _round_up(int(block_rows), 8))
    else:
        # Size by HBM bytes per logits row; multi-MiB tiles amortize the ~0.35us
        # per-grid-step overhead.  Row cap keeps the (tn,1) targets buffers modest.
        tn = buf_budget // max(c * itemsize, 1)
        tn = max(8, min(8192, (tn // 8) * 8))
    tn = min(tn, _round_up(n, 8))
    if tn >= n:                                  # single full-array block, no over-run
        tn = n

    cpad = _round_up(c, 128)

    def footprint(rows):
        logits_bufs = 2 * rows * cpad * itemsize     # double-buffered logits tiles
        target_bufs = 2 * rows * 128 * 4             # (rows,1) i32, lane-padded in VMEM
        temps = 3 * rows * cpad * 4                  # f32 upcast / exp / select temps
        return logits_bufs + target_bufs + temps + (4 << 20)

    while block_rows is None and tn > 8 and footprint(tn) > limit_cap:
        tn = max(8, ((tn // 2) // 8) * 8)

    vmem_limit = max(32 << 20, min(footprint(tn) + (4 << 20), limit_cap))
    return tn, vmem_limit


def _ce_partial_kernel(logits_ref, targets_ref, out_ref, *, n_valid):
    """Per-block partial sum of per-row cross entropies, broadcast into (8,128)."""
    pid = pl.program_id(0)
    logits = logits_ref[...].astype(jnp.float32)          # (tn, C)
    tgt = targets_ref[...]                                 # (tn, 1) int32
    tn, c = logits.shape

    # Target-logit selection via masked lane-sum (no gather).
    class_ids = jax.lax.broadcasted_iota(jnp.int32, (tn, c), 1)
    tgt_logit = jnp.sum(jnp.where(class_ids == tgt, logits, 0.0),
                        axis=-1, keepdims=True)             # (tn, 1)

    # Numerically stable per-row CE: logsumexp(logits) - logits[target].
    m = jnp.max(logits, axis=-1, keepdims=True)             # (tn, 1)
    lse = m + jnp.log(jnp.sum(jnp.exp(logits - m), axis=-1, keepdims=True))

    # Discard garbage rows of the over-run last block with a select (NaN/Inf-safe).
    row_ids = pid * tn + jax.lax.broadcasted_iota(jnp.int32, (tn, 1), 0)
    ce_rows = jnp.where(row_ids < n_valid, lse - tgt_logit, 0.0)

    partial = jnp.sum(ce_rows)                               # scalar f32
    out_ref[...] = partial + jnp.zeros(out_ref.shape, jnp.float32)


def focal_loss(logits, targets, alpha=ALPHA, gamma=GAMMA, block_rows=None):
    """logits: (N, C) float32/bfloat16, targets: (N,) int class indices -> scalar f32."""
    n, c = logits.shape
    itemsize = jnp.dtype(logits.dtype).itemsize
    tn, vmem_limit = _choose_tile(n, c, itemsize, block_rows)
    grid = -(-n // tn)

    targets2d = targets.astype(jnp.int32).reshape(n, 1)     # metadata-only reshape

    kernel = functools.partial(_ce_partial_kernel, n_valid=n)
    partials = pl.pallas_call(
        kernel,
        out_shape=jax.ShapeDtypeStruct((grid * 8, 128), jnp.float32),
        grid=(grid,),
        in_specs=[
            pl.BlockSpec((tn, c), lambda i: (i, 0)),         # full class dim per block
            pl.BlockSpec((tn, 1), lambda i: (i, 0)),
        ],
        # One lane-dense (8,128) tile per grid step -> independent output blocks, so
        # the axis can be "parallel" (megacore-shardable on v7x).
        out_specs=pl.BlockSpec((8, 128), lambda i: (i, 0)),
        compiler_params=pltpu.CompilerParams(
            dimension_semantics=("parallel",),
            vmem_limit_bytes=vmem_limit,
        ),
    )(logits, targets2d)

    # Tiny finalize in the wrapper (per review): combine partial sums, then the
    # scalar focal transform.
    ce = jnp.sum(partials[::8, 0]) / jnp.float32(n)
    pt = jnp.exp(-ce)
    return jnp.float32(alpha) * (1.0 - pt) ** jnp.float32(gamma) * ce


def _focal_loss_ref(logits, targets, alpha=ALPHA, gamma=GAMMA):
    log_probs = jax.nn.log_softmax(logits.astype(jnp.float32), axis=-1)
    ce = -jnp.mean(jnp.take_along_axis(log_probs, targets[:, None], axis=-1)[:, 0])
    pt = jnp.exp(-ce)
    return alpha * (1.0 - pt) ** gamma * ce


if __name__ == "__main__":
    key = jax.random.PRNGKey(0)
    k1, k2, k3, k4 = jax.random.split(key, 4)

    # Case 1: multi-step grid (tile forced to 8 rows -> 3 steps), aligned batch.
    N1, C1 = 24, 32
    logits1 = jax.random.normal(k1, (N1, C1), dtype=jnp.float32)
    targets1 = jax.random.randint(k2, (N1,), 0, C1, dtype=jnp.int32)
    loss1 = focal_loss(logits1, targets1, block_rows=8)
    jax.block_until_ready(loss1)
    ref1 = _focal_loss_ref(logits1, targets1)
    assert jnp.allclose(loss1, ref1, rtol=2e-5, atol=1e-5), (loss1, ref1)

    # Case 2: ragged N and C (37, 100), default tiling -> single full-array block.
    N2, C2 = 37, 100
    logits2 = jax.random.normal(k3, (N2, C2), dtype=jnp.float32)
    targets2 = jax.random.randint(k4, (N2,), 0, C2, dtype=jnp.int32)
    loss2 = focal_loss(logits2, targets2)
    jax.block_until_ready(loss2)
    ref2 = _focal_loss_ref(logits2, targets2)
    assert jnp.allclose(loss2, ref2, rtol=2e-5, atol=1e-5), (loss2, ref2)

    # Case 3: ragged N with a forced multi-step grid so the last block over-runs
    # (exercises the garbage-row masking path with no host-side padding).
    loss3 = focal_loss(logits2, targets2, block_rows=16)
    jax.block_until_ready(loss3)
    assert jnp.allclose(loss3, ref2, rtol=2e-5, atol=1e-5), (loss3, ref2)

    print("KERNEL_OK")
</pallas_src>

<mosaic_0001>
module attributes {stable_mosaic.version = 11 : i64} {
  func.func @_ce_partial_kernel(%arg0: i32, %arg1: memref<8x32xf32, #tpu.memory_space<vmem>>, %arg2: memref<8x1xi32, #tpu.memory_space<vmem>>, %arg3: memref<8x128xf32, #tpu.memory_space<vmem>>) attributes {dimension_semantics = [#tpu.dimension_semantics<parallel>], iteration_bounds = array<i64: 3>, scalar_prefetch = 0 : i64, scratch_operands = 0 : i64, tpu.core_type = #tpu.core_type<tc>, window_params = [{transform_indices = @transform_0, window_bounds = array<i64: 8, 32>}, {transform_indices = @transform_1, window_bounds = array<i64: 8, 1>}, {transform_indices = @transform_2, window_bounds = array<i64: 8, 128>}]} {
    %c0 = arith.constant 0 : index
    %c0_0 = arith.constant 0 : index
    %0 = vector.load %arg1[%c0, %c0_0] : memref<8x32xf32, #tpu.memory_space<vmem>>, vector<8x32xf32>
    %c0_1 = arith.constant 0 : index
    %c0_2 = arith.constant 0 : index
    %1 = vector.load %arg2[%c0_1, %c0_2] : memref<8x1xi32, #tpu.memory_space<vmem>>, vector<8x1xi32>
    %2 = tpu.iota {dimensions = array<i32: 1>} : vector<8x32xi32>
    %3 = vector.broadcast %1 : vector<8x1xi32> to vector<8x32xi32>
    %4 = arith.cmpi eq, %2, %3 : vector<8x32xi32>
    %cst = arith.constant 0.000000e+00 : f32
    %5 = vector.broadcast %cst : f32 to vector<8x32xf32>
    %6 = arith.select %4, %0, %5 : vector<8x32xi1>, vector<8x32xf32>
    %cst_3 = arith.constant dense<0.000000e+00> : vector<8xf32>
    %7 = vector.multi_reduction <add>, %6, %cst_3 [1] : vector<8x32xf32> to vector<8xf32>
    %8 = vector.shape_cast %7 : vector<8xf32> to vector<8x1xf32>
    %cst_4 = arith.constant dense<0xFF800000> : vector<8xf32>
    %9 = vector.multi_reduction <maximumf>, %0, %cst_4 [1] : vector<8x32xf32> to vector<8xf32>
    %10 = vector.shape_cast %9 : vector<8xf32> to vector<8x1xf32>
    %11 = vector.broadcast %10 : vector<8x1xf32> to vector<8x32xf32>
    %12 = arith.subf %0, %11 : vector<8x32xf32>
    %13 = math.exp %12 : vector<8x32xf32>
    %cst_5 = arith.constant dense<0.000000e+00> : vector<8xf32>
    %14 = vector.multi_reduction <add>, %13, %cst_5 [1] : vector<8x32xf32> to vector<8xf32>
    %15 = vector.shape_cast %14 : vector<8xf32> to vector<8x1xf32>
    %16 = math.log %15 : vector<8x1xf32>
    %17 = arith.addf %10, %16 : vector<8x1xf32>
    %c8_i32 = arith.constant 8 : i32
    %18 = arith.muli %arg0, %c8_i32 : i32
    %19 = tpu.iota {dimensions = array<i32: 0>} : vector<8x1xi32>
    %20 = vector.broadcast %18 : i32 to vector<8x1xi32>
    %21 = arith.addi %20, %19 : vector<8x1xi32>
    %c24_i32 = arith.constant 24 : i32
    %22 = vector.broadcast %c24_i32 : i32 to vector<8x1xi32>
    %23 = arith.cmpi slt, %21, %22 : vector<8x1xi32>
    %24 = arith.subf %17, %8 : vector<8x1xf32>
    %cst_6 = arith.constant 0.000000e+00 : f32
    %25 = vector.broadcast %cst_6 : f32 to vector<8x1xf32>
    %26 = arith.select %23, %24, %25 : vector<8x1xi1>, vector<8x1xf32>
    %27 = vector.shape_cast %26 : vector<8x1xf32> to vector<1x8x1xf32>
    %cst_7 = arith.constant dense<0.000000e+00> : vector<1xf32>
    %28 = vector.multi_reduction <add>, %27, %cst_7 [1, 2] : vector<1x8x1xf32> to vector<1xf32>
    %29 = vector.shape_cast %28 : vector<1xf32> to vector<1x1x1xf32>
    %30 = vector.extract %29[0, 0, 0] : f32 from vector<1x1x1xf32>
    %cst_8 = arith.constant 0.000000e+00 : f32
    %31 = vector.broadcast %cst_8 : f32 to vector<8x128xf32>
    %32 = vector.broadcast %30 : f32 to vector<8x128xf32>
    %33 = arith.addf %32, %31 : vector<8x128xf32>
    %c0_9 = arith.constant 0 : index
    %c0_10 = arith.constant 0 : index
    %34 = vector.load %arg3[%c0_9, %c0_10] : memref<8x128xf32, #tpu.memory_space<vmem>>, vector<8x128xf32>
    tpu.vector_store %arg3[%c0_9, %c0_10], %33 {strides = array<i32>} : memref<8x128xf32, #tpu.memory_space<vmem>>, vector<8x128xf32>,
    return
  }
  func.func @transform_0(%arg0: i32) -> (i32, i32) {
    %c0_i32 = arith.constant 0 : i32
    %c0_i32_0 = arith.constant 0 : i32
    return %arg0, %c0_i32 : i32, i32
  }
  func.func @transform_1(%arg0: i32) -> (i32, i32) {
    %c0_i32 = arith.constant 0 : i32
    %c0_i32_0 = arith.constant 0 : i32
    return %arg0, %c0_i32 : i32, i32
  }
  func.func @transform_2(%arg0: i32) -> (i32, i32) {
    %c0_i32 = arith.constant 0 : i32
    %c0_i32_0 = arith.constant 0 : i32
    return %arg0, %c0_i32 : i32, i32
  }
}

</mosaic_0001>

<llo_original>
// kernel: tpu_custom_call.1
$region0: #{tpu_custom_call.1}
  #allocation0 [shape = 'u32[]', space=smem, size = 0x4, offset = 0x4, fixed_abs, tag = 'smem constant byte address 0x4 - core index']
  #allocation1 [shape = 'u32[144,128]{1,0:T(1,128)}', space=vmem, size = 0x12000, scoped, tag = 'internal scratch']
  %s0 = inlined_call_operand.vmem [shape: f32[24,32], index: 0, kind: input, shape index: {}]
  %s1 = inlined_call_operand.vmem [shape: s32[24,1], index: 1, kind: input, shape index: {}]
  %s2 = inlined_call_operand.hbm [shape: f32[24,128], index: 2, kind: output, shape index: {}]
  %s3 = sld [smem:[#allocation0]]
  $region41: #{tpu_custom_call.1} parent=0
    _
  %s5 = ssub.s32 1, %s3
  %s6 = scalar_select 0, %s5, %s3
  $region1: #{tpu_custom_call.1} parent=0
    #allocation2 [shape = 'u8[8192]{0}', space=vmem, size = 0x2000, scoped, tag = 'output window, operand 0']
    #allocation3 [shape = 's32[2]{0}', space=sflag, size = 0x8, scoped, tag = 'scoped memory for tpu_custom_call.1']
    %7 = vsyncpa [#allocation3], 0
    %s8 = scalar_lea.sflag [#allocation3], 1
    %9 = vsyncpa %s8, 0
    loop: start=0, step=1, limit=5
    $region2: #{tpu_custom_call.1} parent=1 // loop_pre_header
      _
    $region3: #{tpu_custom_call.1} parent=1 // loop_header
      %s11 = sphi 0, %s15
      %p12 = scmp.ge.s32.totalorder %s11, 5
      %s21 = sphi 0, %s23
      %s24 = sphi 0, %s21
      %s25 = sphi 0, %s24
      %s41 = sphi 0, %s25
      %s47 = sphi 0, %s49
      %s50 = sphi 0, %s47
      %s51 = sphi 0, %s50
      %s67 = sphi 0, %s51
      %s73 = sphi 0, %s75
      %s76 = sphi 0, %s73
      %s77 = sphi 0, %s76
      %s93 = sphi 0, %s77
    $region4: #{tpu_custom_call.1} parent=1 // loop_header_branch
      %14 = sbr.rel (%p12) target = $region8
    $region5: #{tpu_custom_call.1} parent=1 // loop_body
      %s16 = ssub.s32 %s11, 1
      %s17 = ssub.s32 %s11, 2
      %s18 = sadd.s32 %s11, 1
      %s19 = ssub.s32 %s11, %s18
      %p20 = scmp.eq.s32.totalorder %s19, 0
      %s22 = sadd.s32 %s21, 1
      %s23 = scalar_select %p20, %s21, %s22
      %p26 = pneg %p20
      %p27 = scmp.eq.s32.totalorder %s11, 2
      %p28 = por %p26, %p27
      %p29 = scmp.ne.s32.totalorder %s21, %s24
      %p30 = scmp.eq.s32.totalorder %s11, 0
      %p31 = por %p29, %p30
      %p32 = scmp.ne.s32.totalorder %s21, %s24
      %p33 = scmp.eq.s32.totalorder %s16, 2
      %p34 = por %p32, %p33
      %p35 = scmp.ne.s32.totalorder %s24, %s25
      %p36 = scmp.eq.s32.totalorder %s16, 0
      %p37 = por %p35, %p36
      %p38 = scmp.ne.s32.totalorder %s24, %s25
      %p39 = scmp.eq.s32.totalorder %s17, 2
      %p40 = por %p38, %p39
      %p42 = scmp.ne.s32.totalorder %s25, %s41
      %p43 = scmp.eq.s32.totalorder %s17, 0
      %p44 = por %p42, %p43
      %s45 = ssub.s32 %s11, %s18
      %p46 = scmp.eq.s32.totalorder %s45, 0
      %s48 = sadd.s32 %s47, 1
      %s49 = scalar_select %p46, %s47, %s48
      %p52 = pneg %p46
      %p53 = scmp.eq.s32.totalorder %s11, 2
      %p54 = por %p52, %p53
      %p55 = scmp.ne.s32.totalorder %s47, %s50
      %p56 = scmp.eq.s32.totalorder %s11, 0
      %p57 = por %p55, %p56
      %p58 = scmp.ne.s32.totalorder %s47, %s50
      %p59 = scmp.eq.s32.totalorder %s16, 2
      %p60 = por %p58, %p59
      %p61 = scmp.ne.s32.totalorder %s50, %s51
      %p62 = scmp.eq.s32.totalorder %s16, 0
      %p63 = por %p61, %p62
      %p64 = scmp.ne.s32.totalorder %s50, %s51
      %p65 = scmp.eq.s32.totalorder %s17, 2
      %p66 = por %p64, %p65
      %p68 = scmp.ne.s32.totalorder %s51, %s67
      %p69 = scmp.eq.s32.totalorder %s17, 0
      %p70 = por %p68, %p69
      %s71 = ssub.s32 %s11, %s18
      %p72 = scmp.eq.s32.totalorder %s71, 0
      %s74 = sadd.s32 %s73, 1
      %s75 = scalar_select %p72, %s73, %s74
      %p78 = pneg %p72
      %p79 = scmp.eq.s32.totalorder %s11, 2
      %p80 = por %p78, %p79
      %p81 = scmp.ne.s32.totalorder %s73, %s76
      %p82 = scmp.eq.s32.totalorder %s11, 0
      %p83 = por %p81, %p82
      %p84 = scmp.ne.s32.totalorder %s73, %s76
      %p85 = scmp.eq.s32.totalorder %s16, 2
      %p86 = por %p84, %p85
      %p87 = scmp.ne.s32.totalorder %s76, %s77
      %p88 = scmp.eq.s32.totalorder %s16, 0
      %p89 = por %p87, %p88
      %p90 = scmp.ne.s32.totalorder %s76, %s77
      %p91 = scmp.eq.s32.totalorder %s17, 2
      %p92 = por %p90, %p91
      %p94 = scmp.ne.s32.totalorder %s77, %s93
      %p95 = scmp.eq.s32.totalorder %s17, 0
      %p96 = por %p94, %p95
      %p97 = scmp.le.s32.totalorder 1, %s11
      %p98 = scmp.lt.s32.totalorder %s11, 4
      %p99 = pnand %p97, %p98
      %p100 = pneg %p99
      // Predicated region
      $region9: #{tpu_custom_call.1} parent=5 // pred_check
        _
      $region10: #{tpu_custom_call.1} parent=5 // pred_check_branch
        %102 = sbr.rel (%p99) target = $region12
      $region11: #{tpu_custom_call.1} parent=5 // pred_region
        %s103 = ssub.s32 %s11, 1
      $region12: #{tpu_custom_call.1} parent=5 // pred_fallthru
        _
      %p104 = scmp.lt.s32.totalorder %s11, 3
      // Predicated region
      $region13: #{tpu_custom_call.1} parent=5 // pred_check
        %p105 = pneg %p104
      $region14: #{tpu_custom_call.1} parent=5 // pred_check_branch
        %107 = sbr.rel (%p105) target = $region16
      $region15: #{tpu_custom_call.1} parent=5 // pred_region
        // Predicated region
        $region17: #{tpu_custom_call.1} parent=15 // pred_check
          %p108 = pneg %p31
        $region18: #{tpu_custom_call.1} parent=15 // pred_check_branch
          %110 = sbr.rel (%p108) target = $region20
        $region19: #{tpu_custom_call.1} parent=15 // pred_region
          %p111 = scmp.lt.s32.totalorder %s11, 2
          %s112 = scalar_select %p111, %s11, 2
          %s113 = smul.addr %s112, 8
          %s114 = scalar_lea.vmem %s0, %s113
        $region20: #{tpu_custom_call.1} parent=15 // pred_fallthru
          _
        // Predicated region
        $region21: #{tpu_custom_call.1} parent=15 // pred_check
          %p115 = pneg %p57
        $region22: #{tpu_custom_call.1} parent=15 // pred_check_branch
          %117 = sbr.rel (%p115) target = $region24
        $region23: #{tpu_custom_call.1} parent=15 // pred_region
          %p118 = scmp.lt.s32.totalorder %s11, 2
          %s119 = scalar_select %p118, %s11, 2
          %s120 = smul.addr %s119, 8
          %s121 = scalar_lea.vmem %s1, %s120
        $region24: #{tpu_custom_call.1} parent=15 // pred_fallthru
          _
      $region16: #{tpu_custom_call.1} parent=5 // pred_fallthru
        _
      %p122 = scmp.le.s32.totalorder 1, %s11
      %p123 = scmp.lt.s32.totalorder %s11, 4
      %p124 = pnand %p122, %p123
      %p125 = pneg %p124
      // Predicated region
      $region25: #{tpu_custom_call.1} parent=5 // pred_check
        _
      $region26: #{tpu_custom_call.1} parent=5 // pred_check_branch
        %127 = sbr.rel (%p124) target = $region28
      $region27: #{tpu_custom_call.1} parent=5 // pred_region
        %s128 = ssub.s32 %s11, 1
        %p129 = scmp.lt.s32.totalorder %s16, 2
        %s130 = scalar_select %p129, %s16, 2
        %s131 = smul.addr %s130, 8
        %s132 = scalar_lea.vmem %s0, %s131
        %p133 = pneg %p37
        %p134 = pneg %p34
        %p135 = scmp.lt.s32.totalorder %s16, 2
        %s136 = scalar_select %p135, %s16, 2
        %s137 = smul.addr %s136, 8
        %s138 = scalar_lea.vmem %s1, %s137
        %p139 = pneg %p63
        %p140 = pneg %p60
        %p141 = pneg %p89
        %p142 = pneg %p86
        %s143 = sand.u32 %s76, 1
        %s144 = scalar_lea.sflag [#allocation3], %s143
        %s145 = sand.u32 %s76, 1
        %s146 = smul.addr %s145, 8
        %s147 = scalar_lea.vmem [#allocation2], %s146
        %p148 = scmp.lt.s32.totalorder %s16, 2
        %s149 = scalar_select %p148, %s16, 2
        %s150 = smul.addr %s149, 8
        %s151 = scalar_lea.vmem %s0, %s150
        %p152 = scmp.lt.s32.totalorder %s16, 2
        %s153 = scalar_select %p152, %s16, 2
        %s154 = smul.addr %s153, 8
        %s155 = scalar_lea.vmem %s1, %s154
        %v156 = vld [vmem:[%s151] sm:$0xff]
        %v157 = vld [vmem:[%s155] sm:$0xff]
        %v158 = vlaneseq
        %v159 = vand.u32 %v158, 127
        %160 = vset.pattern.permute.xlu0 0
        %161 = vperm.xlu0 %160, %v157
        %v162 = vpop.permute.xlu0 %161
        %vm163 = vcmp.eq.s32.totalorder %v159, %v162
        %v164 = vsel %vm163, %v156, 0.0
        %vm165 = vcmask 261120
        %v166 = vsel %vm165, %v164, 0.0
        %167 = vadd.xlane.f32.xlu0 %v166
        %v168 = vpop.xlane.xlu0 %167
        %v169 = vsel %vm165, %v156, -inf
        %170 = vmax.xlane.f32.xlu0 %v169
        %v171 = vpop.xlane.xlu0 %170
        %v172 = vsub.f32 %v156, %v171
        %v173 = vmul.f32 %v172, 1.442695
        %v174 = vpow.pop %v173
        %v175 = vsel %vm165, %v174, 0.0
        %176 = vadd.xlane.f32.xlu0 %v175
        %v177 = vpop.xlane.xlu0 %176
        %v178 = vlog2.pop %v177
        %v179 = vmul.f32 %v178, 0.6931472
        %v180 = vadd.f32 %v171, %v179
        %s181 = smul.u32 %s16, 8
        %v182 = vlaneseq
        %v183 = vshrl.u32 %v182, 7
        %v184 = vstv %s181
        %v185 = vadd.s32 %v184, %v183
        %vm186 = vcmp.lt.s32.totalorder %v185, 24
        %v187 = vsub.f32 %v180, %v168
        %v188 = vsel %vm186, %v187, 0.0
        %vm189 = vcmask 7168
        %v190 = vsel %vm189, %v188, 0.0
        %191 = vadd.xlane.f32.xlu0 %v190
        %v192 = vpop.xlane.xlu0 %191
        %v193 = vrot.slane %v192, 4
        %v194 = vadd.f32 %v192, %v193
        %v195 = vrot.slane %v194, 2
        %v196 = vadd.f32 %v194, %v195
        %v197 = vrot.slane %v196, 1
        %v198 = vadd.f32 %v196, %v197
        %s199 = vtos %v198
        %v200 = vstv %s199
        %v201 = vadd.f32 %v200, 0.0
        %202 = vst [vmem:[%s147] sm:$0xff] %v201
        %s203 = sand.u32 %s76, 1
        %s204 = scalar_lea.sflag [#allocation3], %s203
        %s205 = sand.u32 %s76, 1
        %s206 = smul.addr %s205, 8
        %s207 = scalar_lea.vmem [#allocation2], %s206
        // Predicated region
        $region29: #{tpu_custom_call.1} parent=27 // pred_check
          %p208 = pneg %p86
        $region30: #{tpu_custom_call.1} parent=27 // pred_check_branch
          %210 = sbr.rel (%p208) target = $region32
        $region31: #{tpu_custom_call.1} parent=27 // pred_region
          %s212 = ssub.s32 128, 128
          %213 = vsyncadd %s204, %s212
          %s214 = smul.addr %s16, 128
          %s215 = scalar_lea.hbm %s2, %s214
          %s217 = sshll.u32 %s207, 4
          %s218 = int_to_ptr.vmem [resolvable:$true] %s217
          %220 = dma.vmem_to_hbm [thread:$0]  %s218, 128, %s215, %s204
        $region32: #{tpu_custom_call.1} parent=27 // pred_fallthru
          _
      $region28: #{tpu_custom_call.1} parent=5 // pred_fallthru
        _
      %p221 = scmp.le.s32.totalorder 2, %s11
      // Predicated region
      $region33: #{tpu_custom_call.1} parent=5 // pred_check
        %p222 = pneg %p221
      $region34: #{tpu_custom_call.1} parent=5 // pred_check_branch
        %224 = sbr.rel (%p222) target = $region36
      $region35: #{tpu_custom_call.1} parent=5 // pred_region
        %s225 = ssub.s32 %s11, 2
        // Predicated region
        $region37: #{tpu_custom_call.1} parent=35 // pred_check
          %p226 = pneg %p92
        $region38: #{tpu_custom_call.1} parent=35 // pred_check_branch
          %228 = sbr.rel (%p226) target = $region40
        $region39: #{tpu_custom_call.1} parent=35 // pred_region
          %s229 = sand.u32 %s77, 1
          %s230 = scalar_lea.sflag [#allocation3], %s229
          %s231 = sand.u32 %s77, 1
          %s232 = smul.addr %s231, 8
          %s233 = scalar_lea.vmem [#allocation2], %s232
          %234 = dma.done %s230, 128
        $region40: #{tpu_custom_call.1} parent=35 // pred_fallthru
          _
      $region36: #{tpu_custom_call.1} parent=5 // pred_fallthru
        _
    $region6: #{tpu_custom_call.1} parent=1 // loop_footer
      %s15 = sadd.s32 1, %s11
    $region7: #{tpu_custom_call.1} parent=1 // loop_footer_branch
      %10 = sbr.rel target = $region3
    $region8: #{tpu_custom_call.1} parent=1 // loop_exit
      _
    %235 = vsyncpa [#allocation3], 1
    %s236 = scalar_lea.sflag [#allocation3], 1
    %237 = vsyncpa %s236, 1

</llo_original>
